<compile_context>
chip_gen: v7x
topology: tpu7x:2x2x1
jax: 0.10.0
libtpu: 0.0.40
codegen_flags: <defaults>
</compile_context>

<pallas_src>
import functools

import jax
import jax.numpy as jnp
from jax.experimental import pallas as pl
from jax.experimental.pallas import tpu as pltpu


_VMEM_LIMIT = 48 * 1024 * 1024        # scoped VMEM limit (safe on v5e/v6e/v7x)
_FUSED_BLOCK_BYTES = 4 * 1024 * 1024  # f32 bytes per fused (N, Ct, HW) block
_TWO_PASS_BLOCK_BYTES = 2 * 1024 * 1024
_DEFAULT_HWT_CAP = 65536              # lane-axis tile cap (multiple of 128)


# --------------------------------------------------------------------------- #
# Tiling helpers (pure Python, run at trace time).

def _channel_tile_candidates(C):
    """Valid channel tiles (sublane axis): full C plus multiple-of-8 divisors."""
    return sorted({C} | {c for c in (512, 256, 128, 64, 32, 16, 8) if C % c == 0},
                  reverse=True)


def _fused_channel_tile(N, C, HW):
    """Largest channel tile whose (N, Ct, HW) f32 slab fits the fused budget."""
    for ct in _channel_tile_candidates(C):
        if N * ct * HW * 4 <= _FUSED_BLOCK_BYTES:
            return ct
    return None


def _two_pass_tiles(N, C, HW, hwt_cap):
    """(Nt, Ct, HWt) blocks for the streaming (two-pass) path."""
    # Lane (spatial) tile: full HW when reasonable, else a 128-multiple cap
    # (ragged tail handled by cdiv grid + masking in the stats kernel).
    if HW <= hwt_cap:
        HWt = HW
    else:
        HWt = max(128, (hwt_cap // 128) * 128)
    # Channel tile (sublane axis): smallest multiple-of-8 divisor, else full C.
    Ct = C
    for c in (8, 16, 32, 64, 128, 256):
        if C % c == 0:
            Ct = c
            break
    # Batch tile: largest divisor of N keeping the f32 block under budget.
    Nt = 1
    for n in range(1, N + 1):
        if N % n == 0 and n * Ct * HWt * 4 <= _TWO_PASS_BLOCK_BYTES:
            Nt = n
    # Whole batch fits with headroom -> grow the channel tile instead.
    if Nt == N:
        for c in _channel_tile_candidates(C):
            if N * c * HWt * 4 <= _TWO_PASS_BLOCK_BYTES:
                Ct = c
                break
    return Nt, Ct, HWt


# --------------------------------------------------------------------------- #
# Kernels.

def _brn_fused_kernel(hyper_ref, x_ref, gamma_ref, beta_ref, rmean_ref, rstd_ref,
                      y_ref, nmean_ref, nstd_ref,
                      *, inv_count, eps, momentum):
    """Single-pass training kernel: per-channel slab resident in VMEM.

    Grid: (C // Ct,).  x_ref / y_ref: (N, Ct, HW); params / stats: (Ct, 1);
    hyper_ref (SMEM, f32[2]) = [r_max, d_max].
    """
    x = x_ref[...].astype(jnp.float32)                       # (N, Ct, HW)

    s1 = jnp.sum(x, axis=2, keepdims=True)                   # (N, Ct, 1)
    q1 = jnp.sum(x * x, axis=2, keepdims=True)               # (N, Ct, 1)
    mean = jnp.sum(s1, axis=0) * inv_count                   # (Ct, 1)
    ex2 = jnp.sum(q1, axis=0) * inv_count                    # (Ct, 1)
    var = jnp.maximum(ex2 - mean * mean, 0.0)
    std = jnp.sqrt(var + eps)

    rmean = rmean_ref[...]
    rstd = rstd_ref[...]
    r_max = hyper_ref[0]
    d_max = hyper_ref[1]

    r = jnp.clip(std / rstd, 1.0 / r_max, r_max)
    d = jnp.clip((mean - rmean) / rstd, -d_max, d_max)

    # y = gamma * ((x - mean) * r / std + d) + beta
    #   = x * (gamma * r / std) + (gamma * (d - mean * r / std) + beta)
    g = gamma_ref[...]
    r_over_std = r / std
    scale = g * r_over_std                                   # (Ct, 1)
    shift = g * (d - mean * r_over_std) + beta_ref[...]      # (Ct, 1)

    y_ref[...] = (x * scale[None] + shift[None]).astype(y_ref.dtype)

    nmean_ref[...] = rmean + momentum * (mean - rmean)
    nstd_ref[...] = rstd + momentum * (std - rstd)


def _brn_stats_kernel(hyper_ref, x_ref, gamma_ref, beta_ref, rmean_ref, rstd_ref,
                      scale_ref, shift_ref, nmean_ref, nstd_ref,
                      sum_acc, sq_acc,
                      *, inv_count, eps, momentum, hw, hw_tile, need_mask):
    """Pass 1 (training fallback): per-channel stats -> scale/shift + new stats.

    Grid: (C // Ct, N // Nt, cdiv(HW, HWt)); axes 1 and 2 are the reduction.
    x_ref: (Nt, Ct, HWt); params / outputs: (Ct, 1); scratch: (Ct, 1) f32.
    """
    n = pl.program_id(1)
    l = pl.program_id(2)

    @pl.when(jnp.logical_and(n == 0, l == 0))
    def _():
        sum_acc[...] = jnp.zeros_like(sum_acc)
        sq_acc[...] = jnp.zeros_like(sq_acc)

    x = x_ref[...].astype(jnp.float32)                       # (Nt, Ct, HWt)
    if need_mask:
        # Ragged spatial tail: zero the out-of-bounds lanes (exact for sums).
        lane = jax.lax.broadcasted_iota(jnp.int32, x.shape, 2)
        x = jnp.where(lane < (hw - l * hw_tile), x, 0.0)

    s1 = jnp.sum(x, axis=2, keepdims=True)                   # (Nt, Ct, 1)
    q1 = jnp.sum(x * x, axis=2, keepdims=True)
    sum_acc[...] += jnp.sum(s1, axis=0)                      # (Ct, 1)
    sq_acc[...] += jnp.sum(q1, axis=0)

    is_last = jnp.logical_and(n == pl.num_programs(1) - 1,
                              l == pl.num_programs(2) - 1)

    @pl.when(is_last)
    def _():
        mean = sum_acc[...] * inv_count
        var = jnp.maximum(sq_acc[...] * inv_count - mean * mean, 0.0)
        std = jnp.sqrt(var + eps)

        rmean = rmean_ref[...]
        rstd = rstd_ref[...]
        r_max = hyper_ref[0]
        d_max = hyper_ref[1]

        r = jnp.clip(std / rstd, 1.0 / r_max, r_max)
        d = jnp.clip((mean - rmean) / rstd, -d_max, d_max)

        g = gamma_ref[...]
        r_over_std = r / std
        scale_ref[...] = g * r_over_std
        shift_ref[...] = g * (d - mean * r_over_std) + beta_ref[...]

        nmean_ref[...] = rmean + momentum * (mean - rmean)
        nstd_ref[...] = rstd + momentum * (std - rstd)


def _brn_apply_kernel(x_ref, scale_ref, shift_ref, y_ref):
    """Pass 2 / eval: y = x * scale + shift (single FMA per element)."""
    x = x_ref[...].astype(jnp.float32)                       # (Nt, Ct, HWt)
    y = x * scale_ref[...][None] + shift_ref[...][None]
    y_ref[...] = y.astype(y_ref.dtype)


# --------------------------------------------------------------------------- #
# pallas_call wrappers.

def _apply_tiled(x3, scale, shift, hwt_cap):
    """Streaming elementwise apply: grid ordered (batch, channel, spatial)."""
    N, C, HW = x3.shape
    Nt, Ct, HWt = _two_pass_tiles(N, C, HW, hwt_cap)
    grid = (N // Nt, C // Ct, pl.cdiv(HW, HWt))
    x_spec = pl.BlockSpec((Nt, Ct, HWt), lambda n, c, l: (n, c, l))
    p_spec = pl.BlockSpec((Ct, 1), lambda n, c, l: (c, 0))
    return pl.pallas_call(
        _brn_apply_kernel,
        grid=grid,
        in_specs=[x_spec, p_spec, p_spec],
        out_specs=x_spec,
        out_shape=jax.ShapeDtypeStruct((N, C, HW), x3.dtype),
        compiler_params=pltpu.CompilerParams(
            dimension_semantics=("parallel", "parallel", "arbitrary"),
            vmem_limit_bytes=_VMEM_LIMIT),
    )(x3, scale, shift)


@functools.partial(
    jax.jit, static_argnames=("eps", "momentum", "force_two_pass", "hwt_cap"))
def _brn_train(x, gamma, beta, rmean, rstd, hyper, *,
               eps, momentum, force_two_pass=False, hwt_cap=_DEFAULT_HWT_CAP):
    N, C, H, W = x.shape
    HW = H * W
    x3 = x.reshape(N, C, HW)
    inv_count = 1.0 / float(N * HW)

    smem_spec = pl.BlockSpec(memory_space=pltpu.MemorySpace.SMEM)
    fused_ct = None if force_two_pass else _fused_channel_tile(N, C, HW)

    if fused_ct is not None:
        # ---- fused single-pass path: 1 read + 1 write of x ----
        Ct = fused_ct
        grid = (C // Ct,)
        x_spec = pl.BlockSpec((N, Ct, HW), lambda c: (0, c, 0))
        p_spec = pl.BlockSpec((Ct, 1), lambda c: (c, 0))
        kernel = functools.partial(
            _brn_fused_kernel, inv_count=inv_count,
            eps=float(eps), momentum=float(momentum))
        y3, new_mean, new_std = pl.pallas_call(
            kernel,
            grid=grid,
            in_specs=[smem_spec, x_spec, p_spec, p_spec, p_spec, p_spec],
            out_specs=(x_spec, p_spec, p_spec),
            out_shape=(jax.ShapeDtypeStruct((N, C, HW), x.dtype),
                       jax.ShapeDtypeStruct((C, 1), jnp.float32),
                       jax.ShapeDtypeStruct((C, 1), jnp.float32)),
            compiler_params=pltpu.CompilerParams(
                dimension_semantics=("parallel",),
                vmem_limit_bytes=_VMEM_LIMIT),
        )(hyper, x3, gamma, beta, rmean, rstd)
    else:
        # ---- two-pass streaming fallback: 2 reads + 1 write of x ----
        Nt, Ct, HWt = _two_pass_tiles(N, C, HW, hwt_cap)
        need_mask = (HW % HWt) != 0
        grid = (C // Ct, N // Nt, pl.cdiv(HW, HWt))
        x_spec = pl.BlockSpec((Nt, Ct, HWt), lambda c, n, l: (n, c, l))
        p_spec = pl.BlockSpec((Ct, 1), lambda c, n, l: (c, 0))
        kernel = functools.partial(
            _brn_stats_kernel, inv_count=inv_count, eps=float(eps),
            momentum=float(momentum), hw=HW, hw_tile=HWt, need_mask=need_mask)
        scale, shift, new_mean, new_std = pl.pallas_call(
            kernel,
            grid=grid,
            in_specs=[smem_spec, x_spec, p_spec, p_spec, p_spec, p_spec],
            out_specs=(p_spec, p_spec, p_spec, p_spec),
            out_shape=(jax.ShapeDtypeStruct((C, 1), jnp.float32),) * 4,
            scratch_shapes=[pltpu.VMEM((Ct, 1), jnp.float32),
                            pltpu.VMEM((Ct, 1), jnp.float32)],
            compiler_params=pltpu.CompilerParams(
                dimension_semantics=("parallel", "arbitrary", "arbitrary"),
                vmem_limit_bytes=_VMEM_LIMIT),
        )(hyper, x3, gamma, beta, rmean, rstd)
        y3 = _apply_tiled(x3, scale, shift, hwt_cap)

    return y3.reshape(N, C, H, W), new_mean, new_std


@functools.partial(jax.jit, static_argnames=("hwt_cap",))
def _brn_eval(x, gamma, beta, rmean, rstd, *, hwt_cap=_DEFAULT_HWT_CAP):
    N, C, H, W = x.shape
    HW = H * W
    x3 = x.reshape(N, C, HW)
    # y = (x - rmean)/rstd * gamma + beta  ->  fold into a single FMA.
    inv = 1.0 / rstd
    scale = gamma * inv
    shift = beta - gamma * rmean * inv
    y3 = _apply_tiled(x3, scale, shift, hwt_cap)
    return y3.reshape(N, C, H, W)


# --------------------------------------------------------------------------- #
# Module wrapper (forward-only port of the PyTorch BatchRenorm2D).

class BatchRenorm2D:
    def __init__(self, num_features, gamma=None, beta=None, running_mean=None,
                 running_var=None, eps=1e-05, momentum=0.01,
                 r_d_max_inc_step=0.0001, r_max=1.0, d_max=0.0,
                 max_r_max=3.0, max_d_max=5.0):
        C = num_features
        self.num_features = C
        self.eps = float(eps)
        self.momentum = float(momentum)

        if gamma is None:
            self.gamma = jnp.ones((C, 1), jnp.float32)
        else:
            self.gamma = jnp.asarray(gamma, jnp.float32).reshape(C, 1)
        if beta is None:
            self.beta = jnp.zeros((C, 1), jnp.float32)
        else:
            self.beta = jnp.asarray(beta, jnp.float32).reshape(C, 1)

        if running_mean is None:
            # NOTE: matches the PyTorch module exactly (mean=ones, std=zeros);
            # dividing by std=0 on the first training step gives inf/NaN there
            # too.  Seed running_var to avoid this.
            self.running_avg_mean = jnp.ones((C, 1), jnp.float32)
            self.running_avg_std = jnp.zeros((C, 1), jnp.float32)
        else:
            self.running_avg_mean = jnp.asarray(
                running_mean, jnp.float32).reshape(C, 1)
            self.running_avg_std = jnp.sqrt(
                jnp.asarray(running_var, jnp.float32).reshape(C, 1))

        self.max_r_max = float(max_r_max)
        self.max_d_max = float(max_d_max)
        self.r_max_inc_step = float(r_d_max_inc_step)
        self.d_max_inc_step = float(r_d_max_inc_step)
        self.r_max = float(r_max)
        self.d_max = float(d_max)
        self.training = True

        # Test / tuning knobs (not part of the PyTorch interface).
        self._force_two_pass = False
        self._hwt_cap = _DEFAULT_HWT_CAP

    def __call__(self, x):
        N, C, H, W = x.shape
        assert C == self.num_features

        if self.training:
            # r_max/d_max change every step -> pass via SMEM (no recompiles).
            hyper = jnp.array([self.r_max, self.d_max], dtype=jnp.float32)
            y, new_mean, new_std = _brn_train(
                x, self.gamma, self.beta,
                self.running_avg_mean, self.running_avg_std, hyper,
                eps=self.eps, momentum=self.momentum,
                force_two_pass=self._force_two_pass, hwt_cap=self._hwt_cap)
            # Scalar hyper-parameter state updates (host side, as in PyTorch).
            if self.r_max < self.max_r_max:
                self.r_max += self.r_max_inc_step * N
            if self.d_max < self.max_d_max:
                self.d_max += self.d_max_inc_step * N
            self.running_avg_mean = new_mean
            self.running_avg_std = new_std
        else:
            y = _brn_eval(x, self.gamma, self.beta,
                          self.running_avg_mean, self.running_avg_std,
                          hwt_cap=self._hwt_cap)
        return y


# --------------------------------------------------------------------------- #
# Pure-JAX references (replicas of the PyTorch forward).

def _reference_train(x, gamma, beta, rmean, rstd, eps, r_max, d_max):
    mean = jnp.mean(x, axis=(0, 2, 3), keepdims=True)
    var = jnp.var(x, axis=(0, 2, 3), keepdims=True)          # unbiased=False
    std = jnp.sqrt(var + eps)
    g = gamma.reshape(1, -1, 1, 1)
    b = beta.reshape(1, -1, 1, 1)
    rm = rmean.reshape(1, -1, 1, 1)
    rs = rstd.reshape(1, -1, 1, 1)
    r = jnp.clip(std / rs, 1.0 / r_max, r_max)
    d = jnp.clip((mean - rm) / rs, -d_max, d_max)
    xh = (x - mean) * r / std + d
    return g * xh + b


def _reference_eval(x, gamma, beta, rmean, rstd):
    g = gamma.reshape(1, -1, 1, 1)
    b = beta.reshape(1, -1, 1, 1)
    rm = rmean.reshape(1, -1, 1, 1)
    rs = rstd.reshape(1, -1, 1, 1)
    return g * ((x - rm) / rs) + b


if __name__ == "__main__":
    key = jax.random.PRNGKey(0)
    keys = jax.random.split(key, 10)

    # ---------------- main shape: (2, 4, 16, 16), fused training path -------
    N, C, H, W = 2, 4, 16, 16
    x = jax.random.normal(keys[0], (N, C, H, W), dtype=jnp.float32) * 2.0 + 0.5
    gamma = 1.0 + 0.1 * jax.random.normal(keys[1], (C,), dtype=jnp.float32)
    beta = 0.1 * jax.random.normal(keys[2], (C,), dtype=jnp.float32)
    running_mean = 0.2 * jax.random.normal(keys[3], (C,), dtype=jnp.float32)
    running_var = 1.0 + 0.3 * jax.nn.sigmoid(
        jax.random.normal(keys[4], (C,), dtype=jnp.float32))

    mod = BatchRenorm2D(C, gamma=gamma, beta=beta,
                        running_mean=running_mean, running_var=running_var,
                        r_max=2.0, d_max=1.0)
    rmean0, rstd0 = mod.running_avg_mean, mod.running_avg_std
    r_max0, d_max0 = mod.r_max, mod.d_max

    y = jax.block_until_ready(mod(x))                        # training, fused
    y_ref = _reference_train(x, gamma, beta, rmean0, rstd0,
                             mod.eps, r_max0, d_max0)
    assert y.shape == (N, C, H, W)
    assert jnp.allclose(y, y_ref, atol=1e-4, rtol=1e-4), \
        float(jnp.max(jnp.abs(y - y_ref)))

    mean_ref = jnp.mean(x, axis=(0, 2, 3)).reshape(C, 1)
    std_ref = jnp.sqrt(jnp.var(x, axis=(0, 2, 3)).reshape(C, 1) + mod.eps)
    nm_ref = rmean0 + mod.momentum * (mean_ref - rmean0)
    ns_ref = rstd0 + mod.momentum * (std_ref - rstd0)
    assert jnp.allclose(mod.running_avg_mean, nm_ref, atol=1e-5, rtol=1e-5)
    assert jnp.allclose(mod.running_avg_std, ns_ref, atol=1e-5, rtol=1e-5)

    # ---------------- same shape, forced two-pass (stats + apply) path ------
    mod2 = BatchRenorm2D(C, gamma=gamma, beta=beta,
                         running_mean=running_mean, running_var=running_var,
                         r_max=2.0, d_max=1.0)
    mod2._force_two_pass = True
    y2 = jax.block_until_ready(mod2(x))
    assert jnp.allclose(y2, y_ref, atol=1e-4, rtol=1e-4), \
        float(jnp.max(jnp.abs(y2 - y_ref)))
    assert jnp.allclose(mod2.running_avg_mean, nm_ref, atol=1e-5, rtol=1e-5)
    assert jnp.allclose(mod2.running_avg_std, ns_ref, atol=1e-5, rtol=1e-5)

    # ---------------- eval mode (uses updated running stats) ----------------
    mod.training = False
    y_eval = jax.block_until_ready(mod(x))
    y_eval_ref = _reference_eval(x, gamma, beta,
                                 mod.running_avg_mean, mod.running_avg_std)
    assert jnp.allclose(y_eval, y_eval_ref, atol=1e-4, rtol=1e-4), \
        float(jnp.max(jnp.abs(y_eval - y_eval_ref)))

    # ------- ragged spatial size (13x13=169), forced two-pass + lane mask ---
    N3, C3, H3, W3 = 2, 8, 13, 13
    x3 = jax.random.normal(keys[5], (N3, C3, H3, W3), jnp.float32) * 2.0 + 0.5
    g3 = 1.0 + 0.1 * jax.random.normal(keys[6], (C3,), dtype=jnp.float32)
    b3 = 0.1 * jax.random.normal(keys[7], (C3,), dtype=jnp.float32)
    rm3 = 0.2 * jax.random.normal(keys[8], (C3,), dtype=jnp.float32)
    rv3 = 1.0 + 0.3 * jax.nn.sigmoid(
        jax.random.normal(keys[9], (C3,), dtype=jnp.float32))

    mod3 = BatchRenorm2D(C3, gamma=g3, beta=b3, running_mean=rm3,
                         running_var=rv3, r_max=2.0, d_max=1.0)
    mod3._force_two_pass = True
    mod3._hwt_cap = 128                       # force HWt=128 -> masked tail
    rmean3, rstd3 = mod3.running_avg_mean, mod3.running_avg_std
    y3 = jax.block_until_ready(mod3(x3))
    y3_ref = _reference_train(x3, g3, b3, rmean3, rstd3, mod3.eps, 2.0, 1.0)
    assert jnp.allclose(y3, y3_ref, atol=1e-4, rtol=1e-4), \
        float(jnp.max(jnp.abs(y3 - y3_ref)))

    print("KERNEL_OK")
</pallas_src>

<mosaic_0001>
module attributes {stable_mosaic.version = 11 : i64} {
  func.func @_brn_fused_kernel(%arg0: i32, %arg1: memref<2xf32, #tpu.memory_space<smem>>, %arg2: memref<2x4x256xf32, #tpu.memory_space<vmem>>, %arg3: memref<4x1xf32, #tpu.memory_space<vmem>>, %arg4: memref<4x1xf32, #tpu.memory_space<vmem>>, %arg5: memref<4x1xf32, #tpu.memory_space<vmem>>, %arg6: memref<4x1xf32, #tpu.memory_space<vmem>>, %arg7: memref<2x4x256xf32, #tpu.memory_space<vmem>>, %arg8: memref<4x1xf32, #tpu.memory_space<vmem>>, %arg9: memref<4x1xf32, #tpu.memory_space<vmem>>) attributes {dimension_semantics = [#tpu.dimension_semantics<parallel>], iteration_bounds = array<i64: 1>, scalar_prefetch = 0 : i64, scratch_operands = 0 : i64, tpu.core_type = #tpu.core_type<tc>, window_params = [{transform_indices = @transform_0, window_bounds = array<i64: 2>}, {transform_indices = @transform_1, window_bounds = array<i64: 2, 4, 256>}, {transform_indices = @transform_2, window_bounds = array<i64: 4, 1>}, {transform_indices = @transform_3, window_bounds = array<i64: 4, 1>}, {transform_indices = @transform_4, window_bounds = array<i64: 4, 1>}, {transform_indices = @transform_5, window_bounds = array<i64: 4, 1>}, {transform_indices = @transform_6, window_bounds = array<i64: 2, 4, 256>}, {transform_indices = @transform_7, window_bounds = array<i64: 4, 1>}, {transform_indices = @transform_8, window_bounds = array<i64: 4, 1>}]} {
    %c0 = arith.constant 0 : index
    %c0_0 = arith.constant 0 : index
    %c0_1 = arith.constant 0 : index
    %0 = vector.load %arg2[%c0, %c0_0, %c0_1] : memref<2x4x256xf32, #tpu.memory_space<vmem>>, vector<2x4x256xf32>
    %cst = arith.constant dense<0.000000e+00> : vector<2x4xf32>
    %1 = vector.multi_reduction <add>, %0, %cst [2] : vector<2x4x256xf32> to vector<2x4xf32>
    %2 = vector.shape_cast %1 : vector<2x4xf32> to vector<2x4x1xf32>
    %3 = arith.mulf %0, %0 : vector<2x4x256xf32>
    %cst_2 = arith.constant dense<0.000000e+00> : vector<2x4xf32>
    %4 = vector.multi_reduction <add>, %3, %cst_2 [2] : vector<2x4x256xf32> to vector<2x4xf32>
    %5 = vector.shape_cast %4 : vector<2x4xf32> to vector<2x4x1xf32>
    %cst_3 = arith.constant dense<0.000000e+00> : vector<4x1xf32>
    %6 = vector.multi_reduction <add>, %2, %cst_3 [0] : vector<2x4x1xf32> to vector<4x1xf32>
    %cst_4 = arith.constant 0.001953125 : f32
    %7 = vector.broadcast %cst_4 : f32 to vector<4x1xf32>
    %8 = arith.mulf %6, %7 : vector<4x1xf32>
    %cst_5 = arith.constant dense<0.000000e+00> : vector<4x1xf32>
    %9 = vector.multi_reduction <add>, %5, %cst_5 [0] : vector<2x4x1xf32> to vector<4x1xf32>
    %cst_6 = arith.constant 0.001953125 : f32
    %10 = vector.broadcast %cst_6 : f32 to vector<4x1xf32>
    %11 = arith.mulf %9, %10 : vector<4x1xf32>
    %12 = arith.mulf %8, %8 : vector<4x1xf32>
    %13 = arith.subf %11, %12 : vector<4x1xf32>
    %cst_7 = arith.constant 0.000000e+00 : f32
    %14 = vector.broadcast %cst_7 : f32 to vector<4x1xf32>
    %15 = arith.maximumf %13, %14 : vector<4x1xf32>
    %cst_8 = arith.constant 9.99999974E-6 : f32
    %16 = vector.broadcast %cst_8 : f32 to vector<4x1xf32>
    %17 = arith.addf %15, %16 : vector<4x1xf32>
    %18 = math.sqrt %17 : vector<4x1xf32>
    %c0_9 = arith.constant 0 : index
    %c0_10 = arith.constant 0 : index
    %19 = vector.load %arg5[%c0_9, %c0_10] : memref<4x1xf32, #tpu.memory_space<vmem>>, vector<4x1xf32>
    %c0_11 = arith.constant 0 : index
    %c0_12 = arith.constant 0 : index
    %20 = vector.load %arg6[%c0_11, %c0_12] : memref<4x1xf32, #tpu.memory_space<vmem>>, vector<4x1xf32>
    %c0_13 = arith.constant 0 : index
    %21 = memref.load %arg1[%c0_13] : memref<2xf32, #tpu.memory_space<smem>>
    %c1 = arith.constant 1 : index
    %22 = memref.load %arg1[%c1] : memref<2xf32, #tpu.memory_space<smem>>
    %23 = arith.divf %18, %20 : vector<4x1xf32>
    %cst_14 = arith.constant 1.000000e+00 : f32
    %24 = arith.divf %cst_14, %21 : f32
    %25 = vector.broadcast %24 : f32 to vector<4x1xf32>
    %26 = arith.maximumf %25, %23 : vector<4x1xf32>
    %27 = vector.broadcast %21 : f32 to vector<4x1xf32>
    %28 = arith.minimumf %27, %26 : vector<4x1xf32>
    %29 = arith.subf %8, %19 : vector<4x1xf32>
    %30 = arith.divf %29, %20 : vector<4x1xf32>
    %cst_15 = arith.constant 0.000000e+00 : f32
    %31 = arith.subf %cst_15, %22 : f32
    %32 = vector.broadcast %31 : f32 to vector<4x1xf32>
    %33 = arith.maximumf %32, %30 : vector<4x1xf32>
    %34 = vector.broadcast %22 : f32 to vector<4x1xf32>
    %35 = arith.minimumf %34, %33 : vector<4x1xf32>
    %c0_16 = arith.constant 0 : index
    %c0_17 = arith.constant 0 : index
    %36 = vector.load %arg3[%c0_16, %c0_17] : memref<4x1xf32, #tpu.memory_space<vmem>>, vector<4x1xf32>
    %37 = arith.divf %28, %18 : vector<4x1xf32>
    %38 = arith.mulf %36, %37 : vector<4x1xf32>
    %39 = arith.mulf %8, %37 : vector<4x1xf32>
    %40 = arith.subf %35, %39 : vector<4x1xf32>
    %41 = arith.mulf %36, %40 : vector<4x1xf32>
    %c0_18 = arith.constant 0 : index
    %c0_19 = arith.constant 0 : index
    %42 = vector.load %arg4[%c0_18, %c0_19] : memref<4x1xf32, #tpu.memory_space<vmem>>, vector<4x1xf32>
    %43 = arith.addf %41, %42 : vector<4x1xf32>
    %44 = vector.shape_cast %38 : vector<4x1xf32> to vector<1x4x1xf32>
    %45 = vector.broadcast %44 : vector<1x4x1xf32> to vector<2x4x256xf32>
    %46 = arith.mulf %0, %45 : vector<2x4x256xf32>
    %47 = vector.shape_cast %43 : vector<4x1xf32> to vector<1x4x1xf32>
    %48 = vector.broadcast %47 : vector<1x4x1xf32> to vector<2x4x256xf32>
    %49 = arith.addf %46, %48 : vector<2x4x256xf32>
    %c0_20 = arith.constant 0 : index
    %c0_21 = arith.constant 0 : index
    %c0_22 = arith.constant 0 : index
    %50 = vector.load %arg7[%c0_20, %c0_21, %c0_22] : memref<2x4x256xf32, #tpu.memory_space<vmem>>, vector<2x4x256xf32>
    tpu.vector_store %arg7[%c0_20, %c0_21, %c0_22], %49 {strides = array<i32>} : memref<2x4x256xf32, #tpu.memory_space<vmem>>, vector<2x4x256xf32>,
    %51 = arith.subf %8, %19 : vector<4x1xf32>
    %cst_23 = arith.constant 0.00999999977 : f32
    %52 = vector.broadcast %cst_23 : f32 to vector<4x1xf32>
    %53 = arith.mulf %52, %51 : vector<4x1xf32>
    %54 = arith.addf %19, %53 : vector<4x1xf32>
    %c0_24 = arith.constant 0 : index
    %c0_25 = arith.constant 0 : index
    %55 = vector.load %arg8[%c0_24, %c0_25] : memref<4x1xf32, #tpu.memory_space<vmem>>, vector<4x1xf32>
    tpu.vector_store %arg8[%c0_24, %c0_25], %54 {strides = array<i32>} : memref<4x1xf32, #tpu.memory_space<vmem>>, vector<4x1xf32>,
    %56 = arith.subf %18, %20 : vector<4x1xf32>
    %cst_26 = arith.constant 0.00999999977 : f32
    %57 = vector.broadcast %cst_26 : f32 to vector<4x1xf32>
    %58 = arith.mulf %57, %56 : vector<4x1xf32>
    %59 = arith.addf %20, %58 : vector<4x1xf32>
    %c0_27 = arith.constant 0 : index
    %c0_28 = arith.constant 0 : index
    %60 = vector.load %arg9[%c0_27, %c0_28] : memref<4x1xf32, #tpu.memory_space<vmem>>, vector<4x1xf32>
    tpu.vector_store %arg9[%c0_27, %c0_28], %59 {strides = array<i32>} : memref<4x1xf32, #tpu.memory_space<vmem>>, vector<4x1xf32>,
    return
  }
  func.func @transform_0(%arg0: i32) -> i32 {
    %c0_i32 = arith.constant 0 : i32
    %c0_i32_0 = arith.constant 0 : i32
    return %c0_i32 : i32
  }
  func.func @transform_1(%arg0: i32) -> (i32, i32, i32) {
    %c0_i32 = arith.constant 0 : i32
    %c0_i32_0 = arith.constant 0 : i32
    %c0_i32_1 = arith.constant 0 : i32
    return %c0_i32, %arg0, %c0_i32_0 : i32, i32, i32
  }
  func.func @transform_2(%arg0: i32) -> (i32, i32) {
    %c0_i32 = arith.constant 0 : i32
    %c0_i32_0 = arith.constant 0 : i32
    return %arg0, %c0_i32 : i32, i32
  }
  func.func @transform_3(%arg0: i32) -> (i32, i32) {
    %c0_i32 = arith.constant 0 : i32
    %c0_i32_0 = arith.constant 0 : i32
    return %arg0, %c0_i32 : i32, i32
  }
  func.func @transform_4(%arg0: i32) -> (i32, i32) {
    %c0_i32 = arith.constant 0 : i32
    %c0_i32_0 = arith.constant 0 : i32
    return %arg0, %c0_i32 : i32, i32
  }
  func.func @transform_5(%arg0: i32) -> (i32, i32) {
    %c0_i32 = arith.constant 0 : i32
    %c0_i32_0 = arith.constant 0 : i32
    return %arg0, %c0_i32 : i32, i32
  }
  func.func @transform_6(%arg0: i32) -> (i32, i32, i32) {
    %c0_i32 = arith.constant 0 : i32
    %c0_i32_0 = arith.constant 0 : i32
    %c0_i32_1 = arith.constant 0 : i32
    return %c0_i32, %arg0, %c0_i32_0 : i32, i32, i32
  }
  func.func @transform_7(%arg0: i32) -> (i32, i32) {
    %c0_i32 = arith.constant 0 : i32
    %c0_i32_0 = arith.constant 0 : i32
    return %arg0, %c0_i32 : i32, i32
  }
  func.func @transform_8(%arg0: i32) -> (i32, i32) {
    %c0_i32 = arith.constant 0 : i32
    %c0_i32_0 = arith.constant 0 : i32
    return %arg0, %c0_i32 : i32, i32
  }
}

</mosaic_0001>

<llo_original>
// kernel: _brn_train.1
$region0: #{_brn_train.1}
  #allocation0 [shape = 'u32[]', space=smem, size = 0x4, offset = 0x4, fixed_abs, tag = 'smem constant byte address 0x4 - core index']
  #allocation1 [shape = 'u32[144,128]{1,0:T(1,128)}', space=vmem, size = 0x12000, scoped, tag = 'internal scratch']
  %s0 = inlined_call_operand.vmem [shape: f32[2], index: 0, kind: input, shape index: {}]
  %s1 = inlined_call_operand.vmem [shape: f32[2,4,256], index: 1, kind: input, shape index: {}]
  %s2 = inlined_call_operand.vmem [shape: f32[4,1], index: 2, kind: input, shape index: {}]
  %s3 = inlined_call_operand.vmem [shape: f32[4,1], index: 3, kind: input, shape index: {}]
  %s4 = inlined_call_operand.vmem [shape: f32[4,1], index: 4, kind: input, shape index: {}]
  %s5 = inlined_call_operand.vmem [shape: f32[4,1], index: 5, kind: input, shape index: {}]
  %s6 = inlined_call_operand.vmem [shape: f32[2,4,256], index: 6, kind: output, shape index: {0}]
  %s7 = inlined_call_operand.vmem [shape: f32[4,1], index: 7, kind: output, shape index: {1}]
  %s8 = inlined_call_operand.vmem [shape: f32[4,1], index: 8, kind: output, shape index: {2}]
  %9 = xla_tuple %s6, %s7, %s8
  %s10 = sld [smem:[#allocation0]]
  $region54: #{_brn_train.1} parent=0
    _
  %s12 = ssub.s32 1, %s10
  %s13 = scalar_select 0, %s12, %s10
  $region1: #{_brn_train.1} parent=0
    #allocation2 [shape = 'u8[512]{0}', space=smem, size = 0x200, scoped, tag = 'input window, operand 0, single buffered']
    #allocation3 [shape = 's32[1]{0}', space=sflag, size = 0x4, scoped, tag = 'scoped memory for _brn_train.1']
    %14 = vsyncpa [#allocation3], 0
    // Predicated region
    $region2: #{_brn_train.1} parent=1 // pred_check
      _
    $region3: #{_brn_train.1} parent=1 // pred_check_branch
      %16 = sbr.rel (0) target = $region5
    $region4: #{_brn_train.1} parent=1 // pred_region
      %s18 = ssub.s32 16, 16
      %19 = vsyncadd [#allocation3], %s18
      %s21 = sshll.u32 %s0, 4
      %s22 = int_to_ptr.vmem [resolvable:$true] %s21
      %24 = dma.vmem_to_smem %s22, 16, [#allocation2], [#allocation3]
    $region5: #{_brn_train.1} parent=1 // pred_fallthru
      _
    // Predicated region
    $region6: #{_brn_train.1} parent=1 // pred_check
      _
    $region7: #{_brn_train.1} parent=1 // pred_check_branch
      %26 = sbr.rel (0) target = $region9
    $region8: #{_brn_train.1} parent=1 // pred_region
      _
    $region9: #{_brn_train.1} parent=1 // pred_fallthru
      _
    // Predicated region
    $region10: #{_brn_train.1} parent=1 // pred_check
      _
    $region11: #{_brn_train.1} parent=1 // pred_check_branch
      %28 = sbr.rel (0) target = $region13
    $region12: #{_brn_train.1} parent=1 // pred_region
      _
    $region13: #{_brn_train.1} parent=1 // pred_fallthru
      _
    // Predicated region
    $region14: #{_brn_train.1} parent=1 // pred_check
      _
    $region15: #{_brn_train.1} parent=1 // pred_check_branch
      %30 = sbr.rel (0) target = $region17
    $region16: #{_brn_train.1} parent=1 // pred_region
      _
    $region17: #{_brn_train.1} parent=1 // pred_fallthru
      _
    // Predicated region
    $region18: #{_brn_train.1} parent=1 // pred_check
      _
    $region19: #{_brn_train.1} parent=1 // pred_check_branch
      %32 = sbr.rel (0) target = $region21
    $region20: #{_brn_train.1} parent=1 // pred_region
      _
    $region21: #{_brn_train.1} parent=1 // pred_fallthru
      _
    // Predicated region
    $region22: #{_brn_train.1} parent=1 // pred_check
      _
    $region23: #{_brn_train.1} parent=1 // pred_check_branch
      %34 = sbr.rel (0) target = $region25
    $region24: #{_brn_train.1} parent=1 // pred_region
      _
    $region25: #{_brn_train.1} parent=1 // pred_fallthru
      _
    // Predicated region
    $region26: #{_brn_train.1} parent=1 // pred_check
      _
    $region27: #{_brn_train.1} parent=1 // pred_check_branch
      %36 = sbr.rel (0) target = $region29
    $region28: #{_brn_train.1} parent=1 // pred_region
      %37 = dma.done [#allocation3], 16
    $region29: #{_brn_train.1} parent=1 // pred_fallthru
      _
    %38 = sfence
    %v39 = vld [vmem:[%s1] sm:$0xff]
    %v40 = vld [vmem:[%s1 + $0x8] sm:$0xff]
    %v43 = vcombine.high %v39, %v39
    %v44 = vcombine.high %v40, %v40
    %vm47 = vcmask 1043456
    %v48 = vsel %vm47, %v39, 0.0
    %v49 = vsel %vm47, %v43, 0.0
    %v50 = vadd.f32 %v48, %v49
    %51 = vadd.xlane.f32.xlu0 %v50
    %v52 = vpop.xlane.xlu0 %51
    %v53 = vsel %vm47, %v40, 0.0
    %v54 = vsel %vm47, %v44, 0.0
    %v55 = vadd.f32 %v53, %v54
    %56 = vadd.xlane.f32.xlu0 %v55
    %v57 = vpop.xlane.xlu0 %56
    %v58 = vmul.f32 %v39, %v39
    %v59 = vmul.f32 %v40, %v40
    %v62 = vcombine.high %v58, %v58
    %v63 = vcombine.high %v59, %v59
    %v66 = vsel %vm47, %v58, 0.0
    %v67 = vsel %vm47, %v62, 0.0
    %v68 = vadd.f32 %v66, %v67
    %69 = vadd.xlane.f32.xlu0 %v68
    %v70 = vpop.xlane.xlu0 %69
    %v71 = vsel %vm47, %v59, 0.0
    %v72 = vsel %vm47, %v63, 0.0
    %v73 = vadd.f32 %v71, %v72
    %74 = vadd.xlane.f32.xlu0 %v73
    %v75 = vpop.xlane.xlu0 %74
    %v76 = vsel %vm47, %v52, 0.0
    %v77 = vsel %vm47, %v57, 0.0
    %v78 = vadd.f32 %v76, %v77
    %v79 = vmul.f32 %v78, 0.001953125
    %v80 = vsel %vm47, %v70, 0.0
    %v81 = vsel %vm47, %v75, 0.0
    %v82 = vadd.f32 %v80, %v81
    %v83 = vmul.f32 %v82, 0.001953125
    %v84 = vmul.f32 %v79, %v79
    %v85 = vsub.f32 %v83, %v84
    %v86 = vmax.f32 %v85, 0.0
    %v87 = vadd.f32 %v86, 1e-05
    %v88 = vrsqrt.pop %v87
    %v89 = vmul.f32 %v87, %v88
    %vm90 = vcmp.eq.f32.partialorder %v87, inf
    %v91 = vsel %vm90, %v87, %v89
    %vm92 = vcmp.eq.f32.partialorder %v87, 0.0
    %v93 = vand.u32 %v87, 2147483648
    %v94 = vsel %vm92, %v93, %v91
    %v95 = vld [vmem:[%s4] sm:$0xf]
    %v96 = vld [vmem:[%s5] sm:$0xf]
    %s97 = sld [smem:[#allocation2]]
    %s98 = sld [smem:[#allocation2 + $0x1]]
    %v99 = vrcp.pop %v96
    %v100 = vmul.f32 %v94, %v99
    %v101 = vstv %s97
    %v102 = vrcp.pop %v101
    %s103 = vtos %v102
    %v104 = vstv %s103
    %v105 = vmax.f32 %v104, %v100
    %v106 = vstv %s97
    %v107 = vmin.f32 %v106, %v105
    %v108 = vsub.f32 %v79, %v95
    %v109 = vmul.f32 %v108, %v99
    %s110 = ssub.f32 0.0, %s98
    %v111 = vstv %s110
    %v112 = vmax.f32 %v111, %v109
    %v113 = vstv %s98
    %v114 = vmin.f32 %v113, %v112
    %v115 = vld [vmem:[%s2] sm:$0xf]
    %v116 = vrcp.pop %v94
    %v117 = vmul.f32 %v107, %v116
    %v118 = vmul.f32 %v115, %v117
    %v119 = vmul.f32 %v79, %v117
    %v120 = vsub.f32 %v114, %v119
    %v121 = vmul.f32 %v115, %v120
    %v122 = vld [vmem:[%s3] sm:$0xf]
    %v123 = vadd.f32 %v121, %v122
    %125 = vset.pattern.permute.xlu0 0
    %126 = vperm.xlu0 %125, %v118
    %v127 = vpop.permute.xlu0 %126
    %v129 = vunpack.c.l.s4 839922192
    %v130 = vunpack.c.0.s8 %v129
    %v131 = vlaneseq
    %v132 = vshrl.u32 %v131, 7
    %v133 = vsub.s32 %v130, %v132
    %v134 = vrot.slane %v127, %v133
    %v136 = vmul.f32 %v39, %v134
    %v137 = vmul.f32 %v40, %v134
    %139 = vset.pattern.permute.xlu0 0
    %140 = vperm.xlu0 %139, %v123
    %v141 = vpop.permute.xlu0 %140
    %v143 = vunpack.c.l.s4 839922192
    %v144 = vunpack.c.0.s8 %v143
    %v145 = vlaneseq
    %v146 = vshrl.u32 %v145, 7
    %v147 = vsub.s32 %v144, %v146
    %v148 = vrot.slane %v141, %v147
    %v150 = vadd.f32 %v136, %v148
    %v151 = vadd.f32 %v137, %v148
    %152 = vst [vmem:[%s6] sm:$0xff] %v150
    %153 = vst [vmem:[%s6 + $0x8] sm:$0xff] %v151
    %v154 = vmul.f32 %v108, 0.01
    %v155 = vadd.f32 %v95, %v154
    %vm156 = vcmask 3072
    %157 = vst.msk [vmem:[%s7] sm:$0xf] %vm156, %v155
    %v158 = vsub.f32 %v94, %v96
    %v159 = vmul.f32 %v158, 0.01
    %v160 = vadd.f32 %v96, %v159
    %161 = vst.msk [vmem:[%s8] sm:$0xf] %vm156, %v160
    // Predicated region
    $region30: #{_brn_train.1} parent=1 // pred_check
      _
    $region31: #{_brn_train.1} parent=1 // pred_check_branch
      %163 = sbr.rel (0) target = $region33
    $region32: #{_brn_train.1} parent=1 // pred_region
      _
    $region33: #{_brn_train.1} parent=1 // pred_fallthru
      _
    // Predicated region
    $region34: #{_brn_train.1} parent=1 // pred_check
      _
    $region35: #{_brn_train.1} parent=1 // pred_check_branch
      %165 = sbr.rel (0) target = $region37
    $region36: #{_brn_train.1} parent=1 // pred_region
      _
    $region37: #{_brn_train.1} parent=1 // pred_fallthru
      _
    // Predicated region
    $region38: #{_brn_train.1} parent=1 // pred_check
      _
    $region39: #{_brn_train.1} parent=1 // pred_check_branch
      %167 = sbr.rel (0) target = $region41
    $region40: #{_brn_train.1} parent=1 // pred_region
      _
    $region41: #{_brn_train.1} parent=1 // pred_fallthru
      _
    // Predicated region
    $region42: #{_brn_train.1} parent=1 // pred_check
      _
    $region43: #{_brn_train.1} parent=1 // pred_check_branch
      %169 = sbr.rel (0) target = $region45
    $region44: #{_brn_train.1} parent=1 // pred_region
      _
    $region45: #{_brn_train.1} parent=1 // pred_fallthru
      _
    // Predicated region
    $region46: #{_brn_train.1} parent=1 // pred_check
      _
    $region47: #{_brn_train.1} parent=1 // pred_check_branch
      %171 = sbr.rel (0) target = $region49
    $region48: #{_brn_train.1} parent=1 // pred_region
      _
    $region49: #{_brn_train.1} parent=1 // pred_fallthru
      _
    // Predicated region
    $region50: #{_brn_train.1} parent=1 // pred_check
      _
    $region51: #{_brn_train.1} parent=1 // pred_check_branch
      %173 = sbr.rel (0) target = $region53
    $region52: #{_brn_train.1} parent=1 // pred_region
      _
    $region53: #{_brn_train.1} parent=1 // pred_fallthru
      _
    %174 = vsyncpa [#allocation3], 1

</llo_original>
